<compile_context>
chip_gen: v5e
topology: v5e:2x2
jax: 0.10.0
libtpu: 0.0.40
codegen_flags: <defaults>
</compile_context>

<pallas_src>
import functools

import jax
import jax.numpy as jnp
from jax.experimental import pallas as pl
from jax.experimental.pallas import tpu as pltpu

_MIB = 1024 * 1024
_LANE = 128


def _leaky_relu(x, negative_slope=0.1):
    # The original module uses nn.LeakyReLU(0.1) explicitly (not the 0.01 default).
    return jnp.where(x >= 0, x, negative_slope * x)


def _round_up(n, m):
    return ((n + m - 1) // m) * m


def _vmem_capacity_bytes():
    """Per-TensorCore VMEM capacity; conservative fallback = 64 MiB (v7x)."""
    try:
        info = pltpu.get_tpu_info()
        cap = int(getattr(info, "vmem_capacity_bytes", 64 * _MIB))
        return cap if cap > 0 else 64 * _MIB
    except Exception:
        return 64 * _MIB


# --------------- phase 1: streaming seq-sum (HBM-bound reduction) ---------------

def _seqsum_kernel(x_ref, partial_ref):
    # x_ref: (BM, BS, H_pad) bf16 tile; partial_ref: (1, BM, H_pad) f32 block.
    # Accumulate in f32 directly in the reduction (no explicit full-block f32 copy).
    partial_ref[0] = jnp.sum(x_ref[...], axis=1, dtype=jnp.float32)


# --------------- phase 2: classifier head (tiny, MXU epilogue) -------------------

def _head_kernel(p_ref, w1_ref, b1_ref, w2_ref, b2_ref, o_ref, *, inv_seq_len):
    # p_ref: (n_seq_tiles, BM, H_pad) f32 partial seq-sums for this batch tile.
    xm = jnp.sum(p_ref[...], axis=0) * inv_seq_len        # mean over the TRUE seq len
    xm = _leaky_relu(xm, 0.1)

    # fc: H_pad -> 1024 (bf16 operands, f32 accumulation on the MXU)
    h = jnp.dot(xm.astype(jnp.bfloat16), w1_ref[...],
                preferred_element_type=jnp.float32) + b1_ref[...]
    h = _leaky_relu(h, 0.1)

    # fc2: 1024 -> F2, computed into a lane-dense (BM, 128) output block.
    out = jnp.dot(h.astype(jnp.bfloat16), w2_ref[...],
                  preferred_element_type=jnp.float32) + b2_ref[...]
    o_ref[...] = out.astype(o_ref.dtype)


def classifier_head(x, w1_t, b1, w2_t, b2):
    """x: (B, S, H); w1_t: (H, 1024); b1: (1024,); w2_t: (1024, 2); b2: (2,).

    Weights are the PyTorch Linear weights pre-transposed (x @ W.T + b convention).
    """
    B, S, H = x.shape
    F1 = w1_t.shape[1]
    F2 = w2_t.shape[1]

    # ---- generation-aware VMEM budget ----
    vmem_cap = _vmem_capacity_bytes()
    # leave headroom below physical: v5e/v6e (128 MiB) -> 96 MiB, v7x (64 MiB) -> 48 MiB.
    vmem_limit = int(min(max(vmem_cap - 16 * _MIB, 32 * _MIB), 96 * _MIB))

    # ---- tile sizing from the budget ----
    H_pad = _round_up(H, _LANE)            # H maps to lanes
    F2_pad = _round_up(F2, _LANE)          # lane-dense output (no masked vst tail)

    BM = min(128, _round_up(B, 8))         # sublane-aligned batch tile
    B_pad = _round_up(B, BM)

    # x stream gets ~70% of the scoped limit minus the double-buffered partial block;
    # two bf16 buffers of (BM, BS, H_pad) must fit.
    budget = int(vmem_limit * 0.7) - 2 * BM * H_pad * 4
    bs_fit = max(16, budget // (2 * BM * H_pad * 2))
    BS = min((bs_fit // 16) * 16, _round_up(S, 16), 512)  # multiple of 16 (bf16 packing)
    BS = max(BS, 16)
    S_pad = _round_up(S, BS)
    n_seq_tiles = S_pad // BS
    n_batch_tiles = B_pad // BM

    # ---- wrapper-side padding / casts ----
    # Padded seq rows / H lanes are zero -> contribute nothing to the sum; padded w1
    # rows are zero -> fc stays exact; we divide by the true S inside the head kernel.
    x_p = x
    if (B_pad, S_pad, H_pad) != (B, S, H):
        x_p = jnp.pad(x, ((0, B_pad - B), (0, S_pad - S), (0, H_pad - H)))
    x_bf16 = x_p.astype(jnp.bfloat16)

    w1_pad = jnp.zeros((H_pad, F1), jnp.bfloat16).at[:H, :].set(
        w1_t.astype(jnp.bfloat16))
    b1_2d = b1.reshape(1, F1).astype(jnp.float32)
    w2_pad = jnp.zeros((F1, F2_pad), jnp.bfloat16).at[:, :F2].set(
        w2_t.astype(jnp.bfloat16))
    b2_pad = jnp.zeros((1, F2_pad), jnp.float32).at[:, :F2].set(
        b2.astype(jnp.float32))

    # ---- phase 1: per-(batch-tile, seq-tile) partial sums; fully parallel grid ----
    p1_cost = pl.CostEstimate(
        flops=int(B_pad) * int(S_pad) * int(H_pad),
        transcendentals=0,
        bytes_accessed=int(B_pad) * int(S_pad) * int(H_pad) * 2
        + int(n_seq_tiles) * int(B_pad) * int(H_pad) * 4,
    )
    partials = pl.pallas_call(
        _seqsum_kernel,
        out_shape=jax.ShapeDtypeStruct((n_seq_tiles, B_pad, H_pad), jnp.float32),
        grid_spec=pltpu.PrefetchScalarGridSpec(
            num_scalar_prefetch=0,
            grid=(n_batch_tiles, n_seq_tiles),
            in_specs=[pl.BlockSpec((BM, BS, H_pad), lambda b, s: (b, s, 0))],
            out_specs=pl.BlockSpec((1, BM, H_pad), lambda b, s: (s, b, 0)),
        ),
        compiler_params=pltpu.CompilerParams(
            dimension_semantics=("parallel", "parallel"),
            vmem_limit_bytes=vmem_limit,
        ),
        cost_estimate=p1_cost,
    )(x_bf16)

    # ---- phase 2: combine partials + head (mean, LeakyReLU, fc, LeakyReLU, fc2) ----
    kernel = functools.partial(_head_kernel, inv_seq_len=1.0 / float(S))
    p2_cost = pl.CostEstimate(
        flops=2 * int(B_pad) * (int(H_pad) * int(F1) + int(F1) * int(F2_pad)),
        transcendentals=0,
        bytes_accessed=int(n_seq_tiles) * int(B_pad) * int(H_pad) * 4
        + int(H_pad) * int(F1) * 2 + int(F1) * int(F2_pad) * 2
        + int(F1) * 4 + int(F2_pad) * 4 + int(B_pad) * int(F2_pad) * 4,
    )

    def head_call(single_buffer_weights):
        def const_spec(shape):
            # Constant index_map -> resident in VMEM; single-buffer to save headroom.
            if single_buffer_weights:
                return pl.BlockSpec(shape, lambda b: (0, 0),
                                    pipeline_mode=pl.Buffered(1))
            return pl.BlockSpec(shape, lambda b: (0, 0))

        return pl.pallas_call(
            kernel,
            out_shape=jax.ShapeDtypeStruct((B_pad, F2_pad), jnp.float32),
            grid_spec=pltpu.PrefetchScalarGridSpec(
                num_scalar_prefetch=0,
                grid=(n_batch_tiles,),
                in_specs=[
                    pl.BlockSpec((n_seq_tiles, BM, H_pad), lambda b: (0, b, 0)),
                    const_spec((H_pad, F1)),
                    const_spec((1, F1)),
                    const_spec((F1, F2_pad)),
                    const_spec((1, F2_pad)),
                ],
                out_specs=pl.BlockSpec((BM, F2_pad), lambda b: (b, 0)),
            ),
            compiler_params=pltpu.CompilerParams(
                dimension_semantics=("parallel",),
                vmem_limit_bytes=vmem_limit,
            ),
            cost_estimate=p2_cost,
        )(partials, w1_pad, b1_2d, w2_pad, b2_pad)

    try:
        out_padded = head_call(True)
    except Exception:
        # Fallback if this jax build rejects pipeline_mode=pl.Buffered(1) on in_specs.
        out_padded = head_call(False)

    # Padded batch rows contain b1-driven garbage; they are sliced off here and must
    # never be consumed before this slice.
    return out_padded[:B, :F2]


if __name__ == "__main__":
    # Small shapes consistent with the forward pass:
    #   batch=2, seq=8, hidden=32 (stand-in for BERT hidden size), fc=1024, fc2=2
    B, S, H = 2, 8, 32
    F1, F2 = 1024, 2

    key = jax.random.PRNGKey(0)
    kx, kw1, kb1, kw2, kb2 = jax.random.split(key, 5)

    # Synthetic "last_hidden_state" from the (untranslated) BERT encoder.
    x = jax.random.normal(kx, (B, S, H), dtype=jnp.float32)

    # Deterministic parameter init mirroring nn.Linear shapes:
    #   fc.weight  : (1024, H),  fc.bias  : (1024,)
    #   fc2.weight : (2, 1024),  fc2.bias : (2,)
    w1 = jax.random.normal(kw1, (F1, H), dtype=jnp.float32) * 0.02
    b1 = jax.random.normal(kb1, (F1,), dtype=jnp.float32) * 0.02
    w2 = jax.random.normal(kw2, (F2, F1), dtype=jnp.float32) * 0.02
    b2 = jax.random.normal(kb2, (F2,), dtype=jnp.float32) * 0.02

    out = classifier_head(x, w1.T, b1, w2.T, b2)
    out = jax.block_until_ready(out)

    # Pure-JAX f32 reference of the head semantics (kernel uses a bf16 data path for
    # x / matmul operands, so compare with bf16-appropriate tolerances).
    xm = _leaky_relu(x.mean(axis=1), 0.1)
    h = _leaky_relu(xm @ w1.T + b1, 0.1)
    ref = h @ w2.T + b2

    assert out.shape == (B, F2)
    assert jnp.allclose(out, ref, atol=5e-3, rtol=5e-2), (
        f"max abs err {jnp.max(jnp.abs(out - ref))}")

    print("KERNEL_OK")
</pallas_src>

<mosaic_0001>
module attributes {stable_mosaic.version = 11 : i64} {
  func.func @_seqsum_kernel(%arg0: i32, %arg1: i32, %arg2: memref<8x16x128xbf16, #tpu.memory_space<vmem>>, %arg3: memref<1x8x128xf32, #tpu.memory_space<vmem>>) attributes {dimension_semantics = [#tpu.dimension_semantics<parallel>, #tpu.dimension_semantics<parallel>], iteration_bounds = array<i64: 1, 1>, scalar_prefetch = 0 : i64, scratch_operands = 0 : i64, tpu.core_type = #tpu.core_type<tc>, window_params = [{transform_indices = @transform_0, window_bounds = array<i64: 8, 16, 128>}, {transform_indices = @transform_1, window_bounds = array<i64: 1, 8, 128>}]} {
    %c0 = arith.constant 0 : index
    %c0_0 = arith.constant 0 : index
    %c0_1 = arith.constant 0 : index
    %0 = vector.load %arg2[%c0, %c0_0, %c0_1] : memref<8x16x128xbf16, #tpu.memory_space<vmem>>, vector<8x16x128xbf16>
    %1 = arith.extf %0 : vector<8x16x128xbf16> to vector<8x16x128xf32>
    %cst = arith.constant dense<0.000000e+00> : vector<8x128xf32>
    %2 = vector.multi_reduction <add>, %1, %cst [1] : vector<8x16x128xf32> to vector<8x128xf32>
    %c0_2 = arith.constant 0 : index
    %c0_3 = arith.constant 0 : index
    %c0_4 = arith.constant 0 : index
    %3 = vector.load %arg3[%c0_2, %c0_3, %c0_4] : memref<1x8x128xf32, #tpu.memory_space<vmem>>, vector<1x8x128xf32>
    %4 = vector.shape_cast %3 : vector<1x8x128xf32> to vector<8x128xf32>
    %5 = vector.shape_cast %2 : vector<8x128xf32> to vector<1x8x128xf32>
    tpu.vector_store %arg3[%c0_2, %c0_3, %c0_4], %5 {strides = array<i32>} : memref<1x8x128xf32, #tpu.memory_space<vmem>>, vector<1x8x128xf32>,
    return
  }
  func.func @transform_0(%arg0: i32, %arg1: i32) -> (i32, i32, i32) {
    %c0_i32 = arith.constant 0 : i32
    %c0_i32_0 = arith.constant 0 : i32
    return %arg0, %arg1, %c0_i32 : i32, i32, i32
  }
  func.func @transform_1(%arg0: i32, %arg1: i32) -> (i32, i32, i32) {
    %c0_i32 = arith.constant 0 : i32
    %c0_i32_0 = arith.constant 0 : i32
    return %arg1, %arg0, %c0_i32 : i32, i32, i32
  }
}

</mosaic_0001>

<llo_original>
// kernel: tpu_custom_call.1
$region0: #{tpu_custom_call.1}
  #allocation0 [shape = 'u32[]', space=smem, size = 0x4, offset = 0x4, fixed_abs, tag = 'smem constant byte address 0x4 - core index']
  #allocation1 [shape = 'u32[72,128]{1,0:T(1,128)}', space=vmem, size = 0x9000, scoped, tag = 'internal scratch']
  %s0 = inlined_call_operand.hbm [shape: bf16[8,16,128], index: 0, kind: input, shape index: {}]
  %s1 = inlined_call_operand.hbm [shape: f32[1,8,128], index: 1, kind: output, shape index: {}]
  %s2 = sld [smem:[#allocation0]]
  $region18: #{tpu_custom_call.1} parent=0
    _
  %s4 = ssub.s32 1, %s2
  %s5 = scalar_select 0, %s4, %s2
  $region1: #{tpu_custom_call.1} parent=0
    #allocation2 [shape = 'u8[32768]{0}', space=vmem, size = 0x8000, scoped, tag = 'input window, operand 0, single buffered']
    #allocation3 [shape = 's32[1]{0}', space=sflag, size = 0x4, scoped, tag = 'scoped memory for tpu_custom_call.1']
    #allocation4 [shape = 's32[1]{0}', space=sflag, size = 0x4, scoped, tag = 'scoped memory for tpu_custom_call.1']
    #allocation5 [shape = 'u8[4096]{0}', space=vmem, size = 0x1000, scoped, tag = 'output window, operand 0, single buffered']
    %6 = vsyncpa [#allocation3], 0
    %7 = vsyncpa [#allocation4], 0
    // Predicated region
    $region2: #{tpu_custom_call.1} parent=1 // pred_check
      _
    $region3: #{tpu_custom_call.1} parent=1 // pred_check_branch
      %9 = sbr.rel (0) target = $region5
    $region4: #{tpu_custom_call.1} parent=1 // pred_region
      %11 = vsyncadd [#allocation3], 0
      %s12 = sshll.u32 %s0, 4
      %s13 = int_to_ptr.hbm [resolvable:$true] %s12
      %s14 = sshll.u32 [#allocation2], 4
      %s15 = int_to_ptr.vmem [resolvable:$true] %s14
      %20 = dma.hbm_to_vmem [thread:$0]  %s13, 1024, %s15, [#allocation3], 64, 64, 4
    $region5: #{tpu_custom_call.1} parent=1 // pred_fallthru
      _
    // Predicated region
    $region6: #{tpu_custom_call.1} parent=1 // pred_check
      _
    $region7: #{tpu_custom_call.1} parent=1 // pred_check_branch
      %22 = sbr.rel (0) target = $region9
    $region8: #{tpu_custom_call.1} parent=1 // pred_region
      %24 = dma.done [#allocation3], 1024
    $region9: #{tpu_custom_call.1} parent=1 // pred_fallthru
      _
    %v25 = vld [vmem:[#allocation2] sm:$0xf]
    %v26 = vld [vmem:[#allocation2 + $0x4] sm:$0xf]
    %v27 = vld [vmem:[#allocation2 + $0x8] sm:$0xf]
    %v28 = vld [vmem:[#allocation2 + $0xc] sm:$0xf]
    %v29 = vld [vmem:[#allocation2 + $0x10] sm:$0xf]
    %v30 = vld [vmem:[#allocation2 + $0x14] sm:$0xf]
    %v31 = vld [vmem:[#allocation2 + $0x18] sm:$0xf]
    %v32 = vld [vmem:[#allocation2 + $0x1c] sm:$0xf]
    %v33 = vld [vmem:[#allocation2 + $0x20] sm:$0xf]
    %v34 = vld [vmem:[#allocation2 + $0x24] sm:$0xf]
    %v35 = vld [vmem:[#allocation2 + $0x28] sm:$0xf]
    %v36 = vld [vmem:[#allocation2 + $0x2c] sm:$0xf]
    %v37 = vld [vmem:[#allocation2 + $0x30] sm:$0xf]
    %v38 = vld [vmem:[#allocation2 + $0x34] sm:$0xf]
    %v39 = vld [vmem:[#allocation2 + $0x38] sm:$0xf]
    %v40 = vld [vmem:[#allocation2 + $0x3c] sm:$0xf]
    %v41 = vunpack.c.l.bf16 %v25
    %v42 = vunpack.c.l.bf16 %v26
    %v43 = vunpack.c.l.bf16 %v27
    %v44 = vunpack.c.l.bf16 %v28
    %v45 = vunpack.c.l.bf16 %v29
    %v46 = vunpack.c.l.bf16 %v30
    %v47 = vunpack.c.l.bf16 %v31
    %v48 = vunpack.c.l.bf16 %v32
    %v49 = vunpack.c.l.bf16 %v33
    %v50 = vunpack.c.l.bf16 %v34
    %v51 = vunpack.c.l.bf16 %v35
    %v52 = vunpack.c.l.bf16 %v36
    %v53 = vunpack.c.l.bf16 %v37
    %v54 = vunpack.c.l.bf16 %v38
    %v55 = vunpack.c.l.bf16 %v39
    %v56 = vunpack.c.l.bf16 %v40
    %v57 = vadd.f32 %v41, %v42
    %v58 = vrot.slane %v57, 4
    %v59 = vadd.f32 %v57, %v58
    %v60 = vrot.slane %v59, 2
    %v61 = vadd.f32 %v59, %v60
    %v62 = vrot.slane %v61, 1
    %v63 = vadd.f32 %v61, %v62
    %v64 = vadd.f32 %v43, %v44
    %v65 = vrot.slane %v64, 4
    %v66 = vadd.f32 %v64, %v65
    %v67 = vrot.slane %v66, 2
    %v68 = vadd.f32 %v66, %v67
    %v69 = vrot.slane %v68, 1
    %v70 = vadd.f32 %v68, %v69
    %v71 = vadd.f32 %v45, %v46
    %v72 = vrot.slane %v71, 4
    %v73 = vadd.f32 %v71, %v72
    %v74 = vrot.slane %v73, 2
    %v75 = vadd.f32 %v73, %v74
    %v76 = vrot.slane %v75, 1
    %v77 = vadd.f32 %v75, %v76
    %v78 = vadd.f32 %v47, %v48
    %v79 = vrot.slane %v78, 4
    %v80 = vadd.f32 %v78, %v79
    %v81 = vrot.slane %v80, 2
    %v82 = vadd.f32 %v80, %v81
    %v83 = vrot.slane %v82, 1
    %v84 = vadd.f32 %v82, %v83
    %v85 = vadd.f32 %v49, %v50
    %v86 = vrot.slane %v85, 4
    %v87 = vadd.f32 %v85, %v86
    %v88 = vrot.slane %v87, 2
    %v89 = vadd.f32 %v87, %v88
    %v90 = vrot.slane %v89, 1
    %v91 = vadd.f32 %v89, %v90
    %v92 = vadd.f32 %v51, %v52
    %v93 = vrot.slane %v92, 4
    %v94 = vadd.f32 %v92, %v93
    %v95 = vrot.slane %v94, 2
    %v96 = vadd.f32 %v94, %v95
    %v97 = vrot.slane %v96, 1
    %v98 = vadd.f32 %v96, %v97
    %v99 = vadd.f32 %v53, %v54
    %v100 = vrot.slane %v99, 4
    %v101 = vadd.f32 %v99, %v100
    %v102 = vrot.slane %v101, 2
    %v103 = vadd.f32 %v101, %v102
    %v104 = vrot.slane %v103, 1
    %v105 = vadd.f32 %v103, %v104
    %v106 = vadd.f32 %v55, %v56
    %v107 = vrot.slane %v106, 4
    %v108 = vadd.f32 %v106, %v107
    %v109 = vrot.slane %v108, 2
    %v110 = vadd.f32 %v108, %v109
    %v111 = vrot.slane %v110, 1
    %v112 = vadd.f32 %v110, %v111
    %vm121 = vcmask 1041409
    %v122 = vsel %vm121, %v70, %v63
    %vm123 = vcmask 1042434
    %v124 = vsel %vm123, %v77, %v122
    %vm125 = vcmask 1043459
    %v126 = vsel %vm125, %v84, %v124
    %vm127 = vcmask 1044484
    %v128 = vsel %vm127, %v91, %v126
    %vm129 = vcmask 1045509
    %v130 = vsel %vm129, %v98, %v128
    %vm131 = vcmask 1046534
    %v132 = vsel %vm131, %v105, %v130
    %vm133 = vcmask 1047559
    %v134 = vsel %vm133, %v112, %v132
    %136 = vst [vmem:[#allocation5] sm:$0xff] %v134
    // Predicated region
    $region10: #{tpu_custom_call.1} parent=1 // pred_check
      _
    $region11: #{tpu_custom_call.1} parent=1 // pred_check_branch
      %138 = sbr.rel (0) target = $region13
    $region12: #{tpu_custom_call.1} parent=1 // pred_region
      %140 = vsyncadd [#allocation4], 0
      %s142 = sshll.u32 [#allocation5], 4
      %s143 = int_to_ptr.vmem [resolvable:$true] %s142
      %s144 = sshll.u32 %s1, 4
      %s145 = int_to_ptr.hbm [resolvable:$true] %s144
      %147 = dma.vmem_to_hbm [thread:$0]  %s143, 128, %s145, [#allocation4]
    $region13: #{tpu_custom_call.1} parent=1 // pred_fallthru
      _
    // Predicated region
    $region14: #{tpu_custom_call.1} parent=1 // pred_check
      _
    $region15: #{tpu_custom_call.1} parent=1 // pred_check_branch
      %149 = sbr.rel (0) target = $region17
    $region16: #{tpu_custom_call.1} parent=1 // pred_region
      %151 = dma.done [#allocation4], 128
    $region17: #{tpu_custom_call.1} parent=1 // pred_fallthru
      _
    %152 = vsyncpa [#allocation3], 1
    %153 = vsyncpa [#allocation4], 1

</llo_original>
